<compile_context>
chip_gen: v5e
topology: v5e:2x2
jax: 0.10.0
libtpu: 0.0.40
codegen_flags: <defaults>
</compile_context>

<pallas_src>
import functools

import jax
import jax.numpy as jnp
from jax.experimental import pallas as pl
from jax.experimental.pallas import tpu as pltpu

LN_EPS = 1e-5  # torch.nn.LayerNorm default


def _round_up(x, m):
    return ((x + m - 1) // m) * m


def _tpu_vmem_capacity_bytes():
    """Physical VMEM per TensorCore; conservative 64 MiB fallback (v7x)."""
    try:
        cap = getattr(pltpu.get_tpu_info(), "vmem_capacity_bytes", None)
        if cap:
            return int(cap)
    except Exception:
        pass
    return 64 * 1024 * 1024


def _largest_div128(f_pad, cap):
    """Largest multiple of 128 that divides f_pad and is <= cap (f_pad % 128 == 0)."""
    cap = max(128, (cap // 128) * 128)
    for d in range(cap, 0, -128):
        if f_pad % d == 0:
            return d
    return 128


def _select_tiles(M, d_pad, f_pad, tile_rows, ffn_tile, x_itemsize, w_itemsize,
                  budget_bytes):
    """Pick (tm, tf) so the per-step VMEM footprint fits the budget."""
    tf = f_pad if f_pad <= ffn_tile else _largest_div128(f_pad, ffn_tile)
    tm = min(tile_rows, _round_up(M, 8))

    def footprint(tm_, tf_):
        scratch = tm_ * d_pad * (4 + 4 + 2)            # h f32, acc f32, bf16 shadow
        io = 2 * 2 * tm_ * d_pad * x_itemsize          # double-buffered in + out tile
        weights = 2 * 2 * d_pad * tf_ * w_itemsize     # double-buffered W1 + W2 chunk
        hidden = tm_ * tf_ * 4                         # fc1 activation transient
        return scratch + io + weights + hidden

    while footprint(tm, tf) > budget_bytes:
        if tm > 256:
            tm = max(8, _round_up(tm // 2, 8))
        elif tf > 128:
            tf = _largest_div128(f_pad, tf // 2)
        else:
            break
    return tm, tf


def _ffn2d_chain_kernel(x_ref, w1_ref, b1_ref, w2_ref, b2_ref, g_ref, bta_ref,
                        o_ref, h_ref, hb_ref, acc_ref, *, d_real):
    """Fused ffn2d chain on a (TM, Dp) row tile.

    grid = (row_tiles, n_sublayers, ffn_chunks).  h_ref (f32) + hb_ref (bf16
    shadow) carry the activation across the (sublayer, ffn_chunk) axes;
    acc_ref accumulates the fc2 output over F chunks.
    """
    l = pl.program_id(1)
    f = pl.program_id(2)
    n_l = pl.num_programs(1)
    n_f = pl.num_programs(2)

    # Load the input row tile once per row tile (first sublayer, first chunk).
    @pl.when((l == 0) & (f == 0))
    def _():
        xf = x_ref[...].astype(jnp.float32)
        h_ref[...] = xf
        hb_ref[...] = xf.astype(jnp.bfloat16)

    # Zero the fc2 accumulator at the start of every sublayer.
    @pl.when(f == 0)
    def _():
        acc_ref[...] = jnp.zeros_like(acc_ref)

    # fc1 chunk -> bias -> relu -> fc2 chunk, accumulated in f32.
    # MXU operands in bf16 (bf16 shadow, cast hoisted out of the F loop),
    # all elementwise math in f32.
    t = jnp.dot(hb_ref[...], w1_ref[...], preferred_element_type=jnp.float32)
    t = jnp.maximum(t + b1_ref[...], 0.0)
    acc_ref[...] += jnp.dot(t.astype(jnp.bfloat16), w2_ref[...],
                            preferred_element_type=jnp.float32)

    # Last ffn chunk: output bias, residual add and LayerNorm (post-norm).
    @pl.when(f == n_f - 1)
    def _():
        z = h_ref[...] + acc_ref[...] + b2_ref[...]
        d_pad = z.shape[-1]
        if d_real == d_pad:
            mean = jnp.mean(z, axis=-1, keepdims=True)
            cent = z - mean
            var = jnp.mean(cent * cent, axis=-1, keepdims=True)
        else:
            # Lane-padded embed dim: pad lanes of z are zero by construction,
            # so sums over the full lane width / d_real give the exact stats.
            inv_d = 1.0 / float(d_real)
            mean = jnp.sum(z, axis=-1, keepdims=True) * inv_d
            cent = z - mean
            lane = jax.lax.broadcasted_iota(jnp.int32, z.shape, 1)
            cent_m = jnp.where(lane < d_real, cent, 0.0)
            var = jnp.sum(cent_m * cent_m, axis=-1, keepdims=True) * inv_d
        # gamma/beta are zero on pad lanes, so pad lanes of h stay zero.
        h_new = cent * jax.lax.rsqrt(var + LN_EPS) * g_ref[...] + bta_ref[...]
        h_ref[...] = h_new
        hb_ref[...] = h_new.astype(jnp.bfloat16)

    # Last sublayer & last chunk: write the output row tile.
    @pl.when((l == n_l - 1) & (f == n_f - 1))
    def _():
        o_ref[...] = h_ref[...].astype(o_ref.dtype)


def ffn2d_chain(x2d, params, *, tile_rows=1024, ffn_tile=2048):
    """Apply the stacked ffn2d sublayer chain to x2d of shape (M, D)."""
    M, D = x2d.shape
    L, _, F = params["w1"].shape
    w_dtype = params["w1"].dtype

    # Lane padding: embed dim and ffn dim up to multiples of 128.
    d_pad = _round_up(D, 128)
    f_pad = _round_up(F, 128)

    # Generation-aware VMEM budget / limit.
    vmem_cap = _tpu_vmem_capacity_bytes()
    budget = int(vmem_cap * 0.6)          # headroom for Mosaic internal scratch
    vmem_limit = int(vmem_cap * 0.8)

    tm, tf = _select_tiles(M, d_pad, f_pad, tile_rows, ffn_tile,
                           x2d.dtype.itemsize, jnp.dtype(w_dtype).itemsize,
                           budget)
    n_f = f_pad // tf

    # Row padding up to a tile multiple.
    m_pad = _round_up(M, tm)

    # Pad inputs / parameters (all pads are zeros; gamma pad = 0 keeps the
    # pad lanes of the activation at zero across sublayers).
    x_p = x2d
    if m_pad != M or d_pad != D:
        x_p = jnp.pad(x2d, ((0, m_pad - M), (0, d_pad - D)))
    w1 = jnp.pad(params["w1"], ((0, 0), (0, d_pad - D), (0, f_pad - F)))
    b1 = jnp.pad(params["b1"], ((0, 0), (0, 0), (0, f_pad - F)))
    w2 = jnp.pad(params["w2"], ((0, 0), (0, f_pad - F), (0, d_pad - D)))
    b2 = jnp.pad(params["b2"], ((0, 0), (0, 0), (0, d_pad - D)))
    gamma = jnp.pad(params["gamma"], ((0, 0), (0, 0), (0, d_pad - D)))
    beta = jnp.pad(params["beta"], ((0, 0), (0, 0), (0, d_pad - D)))

    grid = (m_pad // tm, L, n_f)
    row_spec = pl.BlockSpec((tm, d_pad), lambda i, l, f: (i, 0))

    # Weights really are re-streamed once per row tile -> count them as such.
    row_tiles = m_pad // tm
    weight_bytes = row_tiles * L * 2 * d_pad * f_pad * jnp.dtype(w_dtype).itemsize
    act_bytes = 2 * m_pad * d_pad * x_p.dtype.itemsize
    cost = pl.CostEstimate(
        flops=4 * m_pad * d_pad * f_pad * L,   # 2 matmuls of 2*M*D*F per sublayer
        transcendentals=m_pad * L,             # one rsqrt per row per LayerNorm
        bytes_accessed=weight_bytes + act_bytes,
    )

    kernel = functools.partial(_ffn2d_chain_kernel, d_real=D)

    out = pl.pallas_call(
        kernel,
        out_shape=jax.ShapeDtypeStruct((m_pad, d_pad), x2d.dtype),
        grid=grid,
        in_specs=[
            row_spec,                                                     # x row tile
            pl.BlockSpec((None, d_pad, tf), lambda i, l, f: (l, 0, f)),   # W1 chunk
            pl.BlockSpec((None, 1, tf), lambda i, l, f: (l, 0, f)),       # b1 chunk
            pl.BlockSpec((None, tf, d_pad), lambda i, l, f: (l, f, 0)),   # W2 chunk
            pl.BlockSpec((None, 1, d_pad), lambda i, l, f: (l, 0, 0)),    # b2
            pl.BlockSpec((None, 1, d_pad), lambda i, l, f: (l, 0, 0)),    # LN gamma
            pl.BlockSpec((None, 1, d_pad), lambda i, l, f: (l, 0, 0)),    # LN beta
        ],
        out_specs=row_spec,
        scratch_shapes=[
            pltpu.VMEM((tm, d_pad), jnp.float32),    # activation (f32, carried)
            pltpu.VMEM((tm, d_pad), jnp.bfloat16),   # bf16 shadow for fc1 operand
            pltpu.VMEM((tm, d_pad), jnp.float32),    # fc2 accumulator
        ],
        compiler_params=pltpu.CompilerParams(
            dimension_semantics=("parallel", "arbitrary", "arbitrary"),
            vmem_limit_bytes=vmem_limit,
        ),
        cost_estimate=cost,
    )(x_p, w1, b1, w2, b2, gamma, beta)

    if m_pad != M or d_pad != D:
        out = out[:M, :D]
    return out


def xavier_uniform(key, fan_in, fan_out, dtype=jnp.float32):
    # matches torch.nn.init.xavier_uniform_ gain=1
    limit = (6.0 / (fan_in + fan_out)) ** 0.5
    return jax.random.uniform(key, (fan_in, fan_out), dtype, -limit, limit)


def make_ffn2d_chain_params(key, n_sublayers, embed_dim, ffn_dim,
                            weight_dtype=jnp.bfloat16):
    """Stacked parameters for n_sublayers ffn2d sublayers (leading axis L)."""
    keys = jax.random.split(key, 2 * n_sublayers)
    w1 = jnp.stack([xavier_uniform(keys[2 * i], embed_dim, ffn_dim)
                    for i in range(n_sublayers)]).astype(weight_dtype)
    w2 = jnp.stack([xavier_uniform(keys[2 * i + 1], ffn_dim, embed_dim)
                    for i in range(n_sublayers)]).astype(weight_dtype)
    return {
        "w1": w1,                                                   # (L, D, F) bf16
        "b1": jnp.zeros((n_sublayers, 1, ffn_dim), jnp.float32),
        "w2": w2,                                                   # (L, F, D) bf16
        "b2": jnp.zeros((n_sublayers, 1, embed_dim), jnp.float32),
        "gamma": jnp.ones((n_sublayers, 1, embed_dim), jnp.float32),
        "beta": jnp.zeros((n_sublayers, 1, embed_dim), jnp.float32),
    }


def parse_layer_chain(layer_chain):
    str2arg = {"enc": False, "dec": True}
    ops = [op.split(":") for op in layer_chain.split("+")]
    out = []
    for op_with_args in ops:
        op = op_with_args[0]
        args = []
        if len(op_with_args) == 2:
            for a in op_with_args[1].split(","):
                if a in str2arg:
                    args.append(str2arg[a])
        out.append((op, args))
    return out


class ReformerDecoderLayerPallas:
    """JAX/Pallas equivalent of ReformerDecoderLayer with an ffn2d-only chain."""

    def __init__(self, key, layer_chain, embed_dim, ffn_dim):
        self.embed_dim = embed_dim
        ops = parse_layer_chain(layer_chain)
        for op, _parsed in ops:
            if op != "ffn2d":
                # TODO(synk): attn1d/SeparableAttention source not provided; skipped.
                raise NotImplementedError(f"sublayer {op!r} not implemented")
        self.n_sublayers = len(ops)
        self.params = make_ffn2d_chain_params(key, self.n_sublayers,
                                              embed_dim, ffn_dim)

    def forward(self, x, encoder_padding_mask=None, incremental_state=None,
                self_attn_mask=None, self_attn_padding_mask=None):
        # x: (seq_len, batch, embed_dim)
        S, B, D = x.shape
        h = ffn2d_chain(x.reshape(S * B, D), self.params)
        return h.reshape(S, B, D), None   # ffn2d sublayers return attn=None


def _reference_forward(layer, x):
    """Pure-JAX reference (same bf16 MXU-operand casting as the kernel)."""
    S, B, D = x.shape
    p = layer.params
    h = x.reshape(S * B, D).astype(jnp.float32)
    for l in range(layer.n_sublayers):
        t = jnp.dot(h.astype(jnp.bfloat16), p["w1"][l],
                    preferred_element_type=jnp.float32) + p["b1"][l]
        t = jnp.maximum(t, 0.0)
        y = jnp.dot(t.astype(jnp.bfloat16), p["w2"][l],
                    preferred_element_type=jnp.float32) + p["b2"][l]
        z = h + y
        mean = jnp.mean(z, axis=-1, keepdims=True)
        var = jnp.mean((z - mean) ** 2, axis=-1, keepdims=True)
        h = (z - mean) * jax.lax.rsqrt(var + LN_EPS) * p["gamma"][l] + p["beta"][l]
    return h.reshape(S, B, D)


if __name__ == "__main__":
    seq_len, batch, embed_dim, ffn_dim = 8, 2, 32, 64

    root = jax.random.PRNGKey(0)
    k_param, k_x = jax.random.split(root)

    layer = ReformerDecoderLayerPallas(k_param, "ffn2d+ffn2d", embed_dim, ffn_dim)

    x = jax.random.normal(k_x, (seq_len, batch, embed_dim), jnp.float32)
    encoder_padding_mask = jnp.zeros((batch, seq_len), jnp.int32)  # unused by ffn2d

    out, attn = layer.forward(x, encoder_padding_mask, incremental_state=None)
    out = jax.block_until_ready(out)

    ref = _reference_forward(layer, x)
    assert out.shape == (seq_len, batch, embed_dim)
    assert attn is None
    assert jnp.allclose(out, ref, atol=2e-2, rtol=2e-2), \
        float(jnp.max(jnp.abs(out - ref)))

    print("KERNEL_OK")
</pallas_src>

<mosaic_0001>
module attributes {stable_mosaic.version = 11 : i64} {
  func.func @_ffn2d_chain_kernel(%arg0: i32, %arg1: i32, %arg2: i32, %arg3: memref<16x128xf32, #tpu.memory_space<vmem>>, %arg4: memref<1x128x128xbf16, #tpu.memory_space<vmem>>, %arg5: memref<1x1x128xf32, #tpu.memory_space<vmem>>, %arg6: memref<1x128x128xbf16, #tpu.memory_space<vmem>>, %arg7: memref<1x1x128xf32, #tpu.memory_space<vmem>>, %arg8: memref<1x1x128xf32, #tpu.memory_space<vmem>>, %arg9: memref<1x1x128xf32, #tpu.memory_space<vmem>>, %arg10: memref<16x128xf32, #tpu.memory_space<vmem>>, %arg11: memref<16x128xf32, #tpu.memory_space<vmem>>, %arg12: memref<16x128xbf16, #tpu.memory_space<vmem>>, %arg13: memref<16x128xf32, #tpu.memory_space<vmem>>) attributes {dimension_semantics = [#tpu.dimension_semantics<parallel>, #tpu.dimension_semantics<arbitrary>, #tpu.dimension_semantics<arbitrary>], iteration_bounds = array<i64: 1, 2, 1>, scalar_prefetch = 0 : i64, scratch_operands = 3 : i64, tpu.core_type = #tpu.core_type<tc>, window_params = [{transform_indices = @transform_0, window_bounds = array<i64: 16, 128>}, {transform_indices = @transform_1, window_bounds = array<i64: 1, 128, 128>}, {transform_indices = @transform_2, window_bounds = array<i64: 1, 1, 128>}, {transform_indices = @transform_3, window_bounds = array<i64: 1, 128, 128>}, {transform_indices = @transform_4, window_bounds = array<i64: 1, 1, 128>}, {transform_indices = @transform_5, window_bounds = array<i64: 1, 1, 128>}, {transform_indices = @transform_6, window_bounds = array<i64: 1, 1, 128>}, {transform_indices = @transform_7, window_bounds = array<i64: 16, 128>}]} {
    %c0_i32 = arith.constant 0 : i32
    %0 = arith.cmpi eq, %arg1, %c0_i32 : i32
    %c0_i32_0 = arith.constant 0 : i32
    %1 = arith.cmpi eq, %arg2, %c0_i32_0 : i32
    %2 = arith.andi %0, %1 : i1
    %3 = arith.extui %2 : i1 to i32
    %c0_i32_1 = arith.constant 0 : i32
    %4 = arith.cmpi ne, %3, %c0_i32_1 : i32
    scf.if %4 {
      %c0_24 = arith.constant 0 : index
      %c0_25 = arith.constant 0 : index
      %33 = vector.load %arg3[%c0_24, %c0_25] : memref<16x128xf32, #tpu.memory_space<vmem>>, vector<16x128xf32>
      %c0_26 = arith.constant 0 : index
      %c0_27 = arith.constant 0 : index
      %34 = vector.load %arg11[%c0_26, %c0_27] : memref<16x128xf32, #tpu.memory_space<vmem>>, vector<16x128xf32>
      tpu.vector_store %arg11[%c0_26, %c0_27], %33 {strides = array<i32>} : memref<16x128xf32, #tpu.memory_space<vmem>>, vector<16x128xf32>,
      %35 = arith.truncf %33 : vector<16x128xf32> to vector<16x128xbf16>
      %c0_28 = arith.constant 0 : index
      %c0_29 = arith.constant 0 : index
      %36 = vector.load %arg12[%c0_28, %c0_29] : memref<16x128xbf16, #tpu.memory_space<vmem>>, vector<16x128xbf16>
      tpu.vector_store %arg12[%c0_28, %c0_29], %35 {strides = array<i32>} : memref<16x128xbf16, #tpu.memory_space<vmem>>, vector<16x128xbf16>,
    } else {
    }
    %c0_i32_2 = arith.constant 0 : i32
    %5 = arith.cmpi eq, %arg2, %c0_i32_2 : i32
    %6 = arith.extui %5 : i1 to i32
    %c0_i32_3 = arith.constant 0 : i32
    %7 = arith.cmpi ne, %6, %c0_i32_3 : i32
    scf.if %7 {
      %cst_24 = arith.constant 0.000000e+00 : f32
      %33 = vector.broadcast %cst_24 : f32 to vector<16x128xf32>
      %c0_25 = arith.constant 0 : index
      %c0_26 = arith.constant 0 : index
      %34 = vector.load %arg13[%c0_25, %c0_26] : memref<16x128xf32, #tpu.memory_space<vmem>>, vector<16x128xf32>
      tpu.vector_store %arg13[%c0_25, %c0_26], %33 {strides = array<i32>} : memref<16x128xf32, #tpu.memory_space<vmem>>, vector<16x128xf32>,
    } else {
    }
    %c0 = arith.constant 0 : index
    %c0_4 = arith.constant 0 : index
    %8 = vector.load %arg12[%c0, %c0_4] : memref<16x128xbf16, #tpu.memory_space<vmem>>, vector<16x128xbf16>
    %c0_5 = arith.constant 0 : index
    %c0_6 = arith.constant 0 : index
    %c0_7 = arith.constant 0 : index
    %9 = vector.load %arg4[%c0_5, %c0_6, %c0_7] : memref<1x128x128xbf16, #tpu.memory_space<vmem>>, vector<1x128x128xbf16>
    %10 = vector.shape_cast %9 : vector<1x128x128xbf16> to vector<128x128xbf16>
    %cst = arith.constant dense<0.000000e+00> : vector<16x128xf32>
    %11 = tpu.matmul %8, %10, %cst {dimension_numbers = #tpu.dot_dimension_numbers<[1], [0], [0], [1], [0, 0, 1, 1], [], []>} : vector<16x128xbf16>, vector<128x128xbf16>, vector<16x128xf32> -> vector<16x128xf32>
    %c0_8 = arith.constant 0 : index
    %c0_9 = arith.constant 0 : index
    %c0_10 = arith.constant 0 : index
    %12 = vector.load %arg5[%c0_8, %c0_9, %c0_10] : memref<1x1x128xf32, #tpu.memory_space<vmem>>, vector<1x1x128xf32>
    %13 = vector.shape_cast %12 : vector<1x1x128xf32> to vector<1x128xf32>
    %14 = vector.broadcast %13 : vector<1x128xf32> to vector<16x128xf32>
    %15 = arith.addf %11, %14 : vector<16x128xf32>
    %cst_11 = arith.constant 0.000000e+00 : f32
    %16 = vector.broadcast %cst_11 : f32 to vector<16x128xf32>
    %17 = arith.maximumf %15, %16 : vector<16x128xf32>
    %c0_12 = arith.constant 0 : index
    %c0_13 = arith.constant 0 : index
    %18 = vector.load %arg13[%c0_12, %c0_13] : memref<16x128xf32, #tpu.memory_space<vmem>>, vector<16x128xf32>
    %19 = arith.truncf %17 : vector<16x128xf32> to vector<16x128xbf16>
    %c0_14 = arith.constant 0 : index
    %c0_15 = arith.constant 0 : index
    %c0_16 = arith.constant 0 : index
    %20 = vector.load %arg6[%c0_14, %c0_15, %c0_16] : memref<1x128x128xbf16, #tpu.memory_space<vmem>>, vector<1x128x128xbf16>
    %21 = vector.shape_cast %20 : vector<1x128x128xbf16> to vector<128x128xbf16>
    %cst_17 = arith.constant dense<0.000000e+00> : vector<16x128xf32>
    %22 = tpu.matmul %19, %21, %cst_17 {dimension_numbers = #tpu.dot_dimension_numbers<[1], [0], [0], [1], [0, 0, 1, 1], [], []>} : vector<16x128xbf16>, vector<128x128xbf16>, vector<16x128xf32> -> vector<16x128xf32>
    %23 = arith.addf %18, %22 : vector<16x128xf32>
    %c0_18 = arith.constant 0 : index
    %c0_19 = arith.constant 0 : index
    %24 = vector.load %arg13[%c0_18, %c0_19] : memref<16x128xf32, #tpu.memory_space<vmem>>, vector<16x128xf32>
    tpu.vector_store %arg13[%c0_18, %c0_19], %23 {strides = array<i32>} : memref<16x128xf32, #tpu.memory_space<vmem>>, vector<16x128xf32>,
    %c0_i32_20 = arith.constant 0 : i32
    %25 = arith.cmpi eq, %arg2, %c0_i32_20 : i32
    %26 = arith.extui %25 : i1 to i32
    %c0_i32_21 = arith.constant 0 : i32
    %27 = arith.cmpi ne, %26, %c0_i32_21 : i32
    scf.if %27 {
      %c0_24 = arith.constant 0 : index
      %c0_25 = arith.constant 0 : index
      %33 = vector.load %arg11[%c0_24, %c0_25] : memref<16x128xf32, #tpu.memory_space<vmem>>, vector<16x128xf32>
      %c0_26 = arith.constant 0 : index
      %c0_27 = arith.constant 0 : index
      %34 = vector.load %arg13[%c0_26, %c0_27] : memref<16x128xf32, #tpu.memory_space<vmem>>, vector<16x128xf32>
      %35 = arith.addf %33, %34 : vector<16x128xf32>
      %c0_28 = arith.constant 0 : index
      %c0_29 = arith.constant 0 : index
      %c0_30 = arith.constant 0 : index
      %36 = vector.load %arg7[%c0_28, %c0_29, %c0_30] : memref<1x1x128xf32, #tpu.memory_space<vmem>>, vector<1x1x128xf32>
      %37 = vector.shape_cast %36 : vector<1x1x128xf32> to vector<1x128xf32>
      %38 = vector.broadcast %37 : vector<1x128xf32> to vector<16x128xf32>
      %39 = arith.addf %35, %38 : vector<16x128xf32>
      %cst_31 = arith.constant dense<0.000000e+00> : vector<16xf32>
      %40 = vector.multi_reduction <add>, %39, %cst_31 [1] : vector<16x128xf32> to vector<16xf32>
      %41 = vector.shape_cast %40 : vector<16xf32> to vector<16x1xf32>
      %cst_32 = arith.constant 3.125000e-02 : f32
      %42 = vector.broadcast %cst_32 : f32 to vector<16x1xf32>
      %43 = arith.mulf %41, %42 : vector<16x1xf32>
      %44 = vector.broadcast %43 : vector<16x1xf32> to vector<16x128xf32>
      %45 = arith.subf %39, %44 : vector<16x128xf32>
      %46 = tpu.iota {dimensions = array<i32: 1>} : vector<16x128xi32>
      %c32_i32 = arith.constant 32 : i32
      %47 = vector.broadcast %c32_i32 : i32 to vector<16x128xi32>
      %48 = arith.cmpi slt, %46, %47 : vector<16x128xi32>
      %cst_33 = arith.constant 0.000000e+00 : f32
      %49 = vector.broadcast %cst_33 : f32 to vector<16x128xf32>
      %50 = arith.select %48, %45, %49 : vector<16x128xi1>, vector<16x128xf32>
      %51 = arith.mulf %50, %50 : vector<16x128xf32>
      %cst_34 = arith.constant dense<0.000000e+00> : vector<16xf32>
      %52 = vector.multi_reduction <add>, %51, %cst_34 [1] : vector<16x128xf32> to vector<16xf32>
      %53 = vector.shape_cast %52 : vector<16xf32> to vector<16x1xf32>
      %cst_35 = arith.constant 3.125000e-02 : f32
      %54 = vector.broadcast %cst_35 : f32 to vector<16x1xf32>
      %55 = arith.mulf %53, %54 : vector<16x1xf32>
      %cst_36 = arith.constant 9.99999974E-6 : f32
      %56 = vector.broadcast %cst_36 : f32 to vector<16x1xf32>
      %57 = arith.addf %55, %56 : vector<16x1xf32>
      %58 = math.rsqrt %57 : vector<16x1xf32>
      %59 = vector.broadcast %58 : vector<16x1xf32> to vector<16x128xf32>
      %60 = arith.mulf %45, %59 : vector<16x128xf32>
      %c0_37 = arith.constant 0 : index
      %c0_38 = arith.constant 0 : index
      %c0_39 = arith.constant 0 : index
      %61 = vector.load %arg8[%c0_37, %c0_38, %c0_39] : memref<1x1x128xf32, #tpu.memory_space<vmem>>, vector<1x1x128xf32>
      %62 = vector.shape_cast %61 : vector<1x1x128xf32> to vector<1x128xf32>
      %63 = vector.broadcast %62 : vector<1x128xf32> to vector<16x128xf32>
      %64 = arith.mulf %60, %63 : vector<16x128xf32>
      %c0_40 = arith.constant 0 : index
      %c0_41 = arith.constant 0 : index
      %c0_42 = arith.constant 0 : index
      %65 = vector.load %arg9[%c0_40, %c0_41, %c0_42] : memref<1x1x128xf32, #tpu.memory_space<vmem>>, vector<1x1x128xf32>
      %66 = vector.shape_cast %65 : vector<1x1x128xf32> to vector<1x128xf32>
      %67 = vector.broadcast %66 : vector<1x128xf32> to vector<16x128xf32>
      %68 = arith.addf %64, %67 : vector<16x128xf32>
      %c0_43 = arith.constant 0 : index
      %c0_44 = arith.constant 0 : index
      %69 = vector.load %arg11[%c0_43, %c0_44] : memref<16x128xf32, #tpu.memory_space<vmem>>, vector<16x128xf32>
      tpu.vector_store %arg11[%c0_43, %c0_44], %68 {strides = array<i32>} : memref<16x128xf32, #tpu.memory_space<vmem>>, vector<16x128xf32>,
      %70 = arith.truncf %68 : vector<16x128xf32> to vector<16x128xbf16>
      %c0_45 = arith.constant 0 : index
      %c0_46 = arith.constant 0 : index
      %71 = vector.load %arg12[%c0_45, %c0_46] : memref<16x128xbf16, #tpu.memory_space<vmem>>, vector<16x128xbf16>
      tpu.vector_store %arg12[%c0_45, %c0_46], %70 {strides = array<i32>} : memref<16x128xbf16, #tpu.memory_space<vmem>>, vector<16x128xbf16>,
    } else {
    }
    %c1_i32 = arith.constant 1 : i32
    %28 = arith.cmpi eq, %arg1, %c1_i32 : i32
    %c0_i32_22 = arith.constant 0 : i32
    %29 = arith.cmpi eq, %arg2, %c0_i32_22 : i32
    %30 = arith.andi %28, %29 : i1
    %31 = arith.extui %30 : i1 to i32
    %c0_i32_23 = arith.constant 0 : i32
    %32 = arith.cmpi ne, %31, %c0_i32_23 : i32
    scf.if %32 {
      %c0_24 = arith.constant 0 : index
      %c0_25 = arith.constant 0 : index
      %33 = vector.load %arg11[%c0_24, %c0_25] : memref<16x128xf32, #tpu.memory_space<vmem>>, vector<16x128xf32>
      %c0_26 = arith.constant 0 : index
      %c0_27 = arith.constant 0 : index
      %34 = vector.load %arg10[%c0_26, %c0_27] : memref<16x128xf32, #tpu.memory_space<vmem>>, vector<16x128xf32>
      tpu.vector_store %arg10[%c0_26, %c0_27], %33 {strides = array<i32>} : memref<16x128xf32, #tpu.memory_space<vmem>>, vector<16x128xf32>,
    } else {
    }
    return
  }
  func.func @transform_0(%arg0: i32, %arg1: i32, %arg2: i32) -> (i32, i32) {
    %c0_i32 = arith.constant 0 : i32
    %c0_i32_0 = arith.constant 0 : i32
    return %arg0, %c0_i32 : i32, i32
  }
  func.func @transform_1(%arg0: i32, %arg1: i32, %arg2: i32) -> (i32, i32, i32) {
    %c0_i32 = arith.constant 0 : i32
    %c0_i32_0 = arith.constant 0 : i32
    return %arg1, %c0_i32, %arg2 : i32, i32, i32
  }
  func.func @transform_2(%arg0: i32, %arg1: i32, %arg2: i32) -> (i32, i32, i32) {
    %c0_i32 = arith.constant 0 : i32
    %c0_i32_0 = arith.constant 0 : i32
    return %arg1, %c0_i32, %arg2 : i32, i32, i32
  }
  func.func @transform_3(%arg0: i32, %arg1: i32, %arg2: i32) -> (i32, i32, i32) {
    %c0_i32 = arith.constant 0 : i32
    %c0_i32_0 = arith.constant 0 : i32
    return %arg1, %arg2, %c0_i32 : i32, i32, i32
  }
  func.func @transform_4(%arg0: i32, %arg1: i32, %arg2: i32) -> (i32, i32, i32) {
    %c0_i32 = arith.constant 0 : i32
    %c0_i32_0 = arith.constant 0 : i32
    %c0_i32_1 = arith.constant 0 : i32
    return %arg1, %c0_i32, %c0_i32_0 : i32, i32, i32
  }
  func.func @transform_5(%arg0: i32, %arg1: i32, %arg2: i32) -> (i32, i32, i32) {
    %c0_i32 = arith.constant 0 : i32
    %c0_i32_0 = arith.constant 0 : i32
    %c0_i32_1 = arith.constant 0 : i32
    return %arg1, %c0_i32, %c0_i32_0 : i32, i32, i32
  }
  func.func @transform_6(%arg0: i32, %arg1: i32, %arg2: i32) -> (i32, i32, i32) {
    %c0_i32 = arith.constant 0 : i32
    %c0_i32_0 = arith.constant 0 : i32
    %c0_i32_1 = arith.constant 0 : i32
    return %arg1, %c0_i32, %c0_i32_0 : i32, i32, i32
  }
  func.func @transform_7(%arg0: i32, %arg1: i32, %arg2: i32) -> (i32, i32) {
    %c0_i32 = arith.constant 0 : i32
    %c0_i32_0 = arith.constant 0 : i32
    return %arg0, %c0_i32 : i32, i32
  }
}

</mosaic_0001>

<llo_original>
// kernel: tpu_custom_call.1
$region0: #{tpu_custom_call.1}
  #allocation0 [shape = 'u32[]', space=smem, size = 0x4, offset = 0x4, fixed_abs, tag = 'smem constant byte address 0x4 - core index']
  #allocation1 [shape = 'u32[72,128]{1,0:T(1,128)}', space=vmem, size = 0x9000, scoped, tag = 'internal scratch']
  #allocation2 [shape = 'f32[16,128]{1,0:T(8,128)}', space=vmem, size = 0x2000, scoped, tag = 'scratch operand']
  #allocation3 [shape = 'bf16[16,128]{1,0:T(8,128)(2,1)}', space=vmem, size = 0x1000, scoped, tag = 'scratch operand']
  #allocation4 [shape = 'f32[16,128]{1,0:T(8,128)}', space=vmem, size = 0x2000, scoped, tag = 'scratch operand']
  %s0 = inlined_call_operand.hbm [shape: f32[16,128], index: 0, kind: input, shape index: {}]
  %s1 = inlined_call_operand.hbm [shape: bf16[2,128,128], index: 1, kind: input, shape index: {}]
  %s2 = inlined_call_operand.hbm [shape: f32[2,1,128], index: 2, kind: input, shape index: {}]
  %s3 = inlined_call_operand.hbm [shape: bf16[2,128,128], index: 3, kind: input, shape index: {}]
  %s4 = inlined_call_operand.vmem [shape: f32[2,1,128], index: 4, kind: input, shape index: {}]
  %s5 = inlined_call_operand.vmem [shape: f32[2,1,128], index: 5, kind: input, shape index: {}]
  %s6 = inlined_call_operand.hbm [shape: f32[2,1,128], index: 6, kind: input, shape index: {}]
  %s7 = inlined_call_operand.hbm [shape: f32[16,128], index: 7, kind: output, shape index: {}]
  %s8 = sld [smem:[#allocation0]]
  $region97: #{tpu_custom_call.1} parent=0
    _
  %s10 = ssub.s32 1, %s8
  %s11 = scalar_select 0, %s10, %s8
  $region1: #{tpu_custom_call.1} parent=0
    #allocation5 [shape = 'u8[8192]{0}', space=vmem, size = 0x2000, scoped, tag = 'input window, operand 0, single buffered']
    #allocation6 [shape = 's32[2]{0}', space=sflag, size = 0x8, scoped, tag = 'scoped memory for tpu_custom_call.1']
    #allocation7 [shape = 's32[2]{0}', space=sflag, size = 0x8, scoped, tag = 'scoped memory for tpu_custom_call.1']
    #allocation8 [shape = 'u8[65536]{0}', space=vmem, size = 0x10000, scoped, tag = 'input window, operand 1']
    #allocation9 [shape = 's32[2]{0}', space=sflag, size = 0x8, scoped, tag = 'scoped memory for tpu_custom_call.1']
    #allocation10 [shape = 'u8[1024]{0}', space=vmem, size = 0x400, scoped, tag = 'input window, operand 2']
    #allocation11 [shape = 'u8[65536]{0}', space=vmem, size = 0x10000, scoped, tag = 'input window, operand 3']
    #allocation12 [shape = 's32[2]{0}', space=sflag, size = 0x8, scoped, tag = 'scoped memory for tpu_custom_call.1']
    #allocation13 [shape = 'u8[1024]{0}', space=vmem, size = 0x400, scoped, tag = 'input window, operand 6']
    #allocation14 [shape = 'u8[8192]{0}', space=vmem, size = 0x2000, scoped, tag = 'output window, operand 0, single buffered']
    %12 = vsyncpa [#allocation6], 0
    %13 = vsyncpa [#allocation9], 0
    %s14 = scalar_lea.sflag [#allocation9], 1
    %15 = vsyncpa %s14, 0
    %16 = vsyncpa [#allocation12], 0
    %s17 = scalar_lea.sflag [#allocation12], 1
    %18 = vsyncpa %s17, 0
    %19 = vsyncpa [#allocation7], 0
    loop: start=0, step=1, limit=4
    $region2: #{tpu_custom_call.1} parent=1 // loop_pre_header
      _
    $region3: #{tpu_custom_call.1} parent=1 // loop_header
      %s21 = sphi 0, %s25
      %p22 = scmp.ge.s32.totalorder %s21, 4
      %s28 = sphi 0, %s47
      %s29 = sphi 0, %s43
      %s30 = sphi 0, %s39
      %s31 = sphi 0, %s28
      %s32 = sphi 0, %s29
      %s33 = sphi 0, %s30
      %s34 = sphi 0, %s31
      %s35 = sphi 0, %s32
      %s36 = sphi 0, %s33
      %s50 = sphi 0, %s52
      %s53 = sphi 0, %s50
      %s54 = sphi 0, %s53
      %s70 = sphi 0, %s54
      %s78 = sphi 0, %s80
      %s81 = sphi 0, %s78
      %s82 = sphi 0, %s81
      %s98 = sphi 0, %s82
      %s106 = sphi 0, %s108
      %s109 = sphi 0, %s106
      %s110 = sphi 0, %s109
      %s126 = sphi 0, %s110
      %s134 = sphi 0, %s136
      %s137 = sphi 0, %s134
      %s138 = sphi 0, %s137
      %s154 = sphi 0, %s138
      %s160 = sphi 0, %s162
      %s163 = sphi 0, %s160
      %s164 = sphi 0, %s163
      %s180 = sphi 0, %s164
      %s186 = sphi 0, %s188
      %s189 = sphi 0, %s186
      %s190 = sphi 0, %s189
      %s206 = sphi 0, %s190
      %s212 = sphi 0, %s214
      %s215 = sphi 0, %s212
      %s216 = sphi 0, %s215
      %s232 = sphi 0, %s216
      %s238 = sphi 0, %s240
      %s241 = sphi 0, %s238
      %s242 = sphi 0, %s241
      %s258 = sphi 0, %s242
    $region4: #{tpu_custom_call.1} parent=1 // loop_header_branch
      %24 = sbr.rel (%p22) target = $region8
    $region5: #{tpu_custom_call.1} parent=1 // loop_body
      %s26 = ssub.s32 %s21, 1
      %s27 = ssub.s32 %s21, 2
      %s37 = sadd.s32 1, %s30
      %p38 = scmp.ge.s32.totalorder %s37, 1
      %s39 = scalar_select %p38, 0, %s37
      %s40 = sadd.s32 1, %s29
      %s41 = scalar_select %p38, %s40, %s29
      %p42 = scmp.ge.s32.totalorder %s41, 2
      %s43 = scalar_select %p42, 0, %s41
      %s44 = sadd.s32 1, %s28
      %s45 = scalar_select %p42, %s44, %s28
      %p46 = scmp.ge.s32.totalorder %s45, 1
      %s47 = scalar_select %p46, 0, %s45
      %s48 = ssub.s32 %s28, %s47
      %p49 = scmp.eq.s32.totalorder %s48, 0
      %s51 = sadd.s32 %s50, 1
      %s52 = scalar_select %p49, %s50, %s51
      %p55 = pneg %p49
      %p56 = scmp.eq.s32.totalorder %s21, 1
      %p57 = por %p55, %p56
      %p58 = scmp.ne.s32.totalorder %s50, %s53
      %p59 = scmp.eq.s32.totalorder %s21, 0
      %p60 = por %p58, %p59
      %p61 = scmp.ne.s32.totalorder %s50, %s53
      %p62 = scmp.eq.s32.totalorder %s26, 1
      %p63 = por %p61, %p62
      %p64 = scmp.ne.s32.totalorder %s53, %s54
      %p65 = scmp.eq.s32.totalorder %s26, 0
      %p66 = por %p64, %p65
      %p67 = scmp.ne.s32.totalorder %s53, %s54
      %p68 = scmp.eq.s32.totalorder %s27, 1
      %p69 = por %p67, %p68
      %p71 = scmp.ne.s32.totalorder %s54, %s70
      %p72 = scmp.eq.s32.totalorder %s27, 0
      %p73 = por %p71, %p72
      %s74 = ssub.s32 %s29, %s43
      %s75 = ssub.s32 %s30, %s39
      %s76 = sor.u32 %s74, %s75
      %p77 = scmp.eq.s32.totalorder %s76, 0
      %s79 = sadd.s32 %s78, 1
      %s80 = scalar_select %p77, %s78, %s79
      %p83 = pneg %p77
      %p84 = scmp.eq.s32.totalorder %s21, 1
      %p85 = por %p83, %p84
      %p86 = scmp.ne.s32.totalorder %s78, %s81
      %p87 = scmp.eq.s32.totalorder %s21, 0
      %p88 = por %p86, %p87
      %p89 = scmp.ne.s32.totalorder %s78, %s81
      %p90 = scmp.eq.s32.totalorder %s26, 1
      %p91 = por %p89, %p90
      %p92 = scmp.ne.s32.totalorder %s81, %s82
      %p93 = scmp.eq.s32.totalorder %s26, 0
      %p94 = por %p92, %p93
      %p95 = scmp.ne.s32.totalorder %s81, %s82
      %p96 = scmp.eq.s32.totalorder %s27, 1
      %p97 = por %p95, %p96
      %p99 = scmp.ne.s32.totalorder %s82, %s98
      %p100 = scmp.eq.s32.totalorder %s27, 0
      %p101 = por %p99, %p100
      %s102 = ssub.s32 %s29, %s43
      %s103 = ssub.s32 %s30, %s39
      %s104 = sor.u32 %s102, %s103
      %p105 = scmp.eq.s32.totalorder %s104, 0
      %s107 = sadd.s32 %s106, 1
      %s108 = scalar_select %p105, %s106, %s107
      %p111 = pneg %p105
      %p112 = scmp.eq.s32.totalorder %s21, 1
      %p113 = por %p111, %p112
      %p114 = scmp.ne.s32.totalorder %s106, %s109
      %p115 = scmp.eq.s32.totalorder %s21, 0
      %p116 = por %p114, %p115
      %p117 = scmp.ne.s32.totalorder %s106, %s109
      %p118 = scmp.eq.s32.totalorder %s26, 1
      %p119 = por %p117, %p118
      %p120 = scmp.ne.s32.totalorder %s109, %s110
      %p121 = scmp.eq.s32.totalorder %s26, 0
      %p122 = por %p120, %p121
      %p123 = scmp.ne.s32.totalorder %s109, %s110
      %p124 = scmp.eq.s32.totalorder %s27, 1
      %p125 = por %p123, %p124
      %p127 = scmp.ne.s32.totalorder %s110, %s126
      %p128 = scmp.eq.s32.totalorder %s27, 0
      %p129 = por %p127, %p128
      %s130 = ssub.s32 %s29, %s43
      %s131 = ssub.s32 %s30, %s39
      %s132 = sor.u32 %s130, %s131
      %p133 = scmp.eq.s32.totalorder %s132, 0
      %s135 = sadd.s32 %s134, 1
      %s136 = scalar_select %p133, %s134, %s135
      %p139 = pneg %p133
      %p140 = scmp.eq.s32.totalorder %s21, 1
      %p141 = por %p139, %p140
      %p142 = scmp.ne.s32.totalorder %s134, %s137
      %p143 = scmp.eq.s32.totalorder %s21, 0
      %p144 = por %p142, %p143
      %p145 = scmp.ne.s32.totalorder %s134, %s137
      %p146 = scmp.eq.s32.totalorder %s26, 1
      %p147 = por %p145, %p146
      %p148 = scmp.ne.s32.totalorder %s137, %s138
      %p149 = scmp.eq.s32.totalorder %s26, 0
      %p150 = por %p148, %p149
      %p151 = scmp.ne.s32.totalorder %s137, %s138
      %p152 = scmp.eq.s32.totalorder %s27, 1
      %p153 = por %p151, %p152
      %p155 = scmp.ne.s32.totalorder %s138, %s154
      %p156 = scmp.eq.s32.totalorder %s27, 0
      %p157 = por %p155, %p156
      %s158 = ssub.s32 %s29, %s43
      %p159 = scmp.eq.s32.totalorder %s158, 0
      %s161 = sadd.s32 %s160, 1
      %s162 = scalar_select %p159, %s160, %s161
      %p165 = pneg %p159
      %p166 = scmp.eq.s32.totalorder %s21, 1
      %p167 = por %p165, %p166
      %p168 = scmp.ne.s32.totalorder %s160, %s163
      %p169 = scmp.eq.s32.totalorder %s21, 0
      %p170 = por %p168, %p169
      %p171 = scmp.ne.s32.totalorder %s160, %s163
      %p172 = scmp.eq.s32.totalorder %s26, 1
      %p173 = por %p171, %p172
      %p174 = scmp.ne.s32.totalorder %s163, %s164
      %p175 = scmp.eq.s32.totalorder %s26, 0
      %p176 = por %p174, %p175
      %p177 = scmp.ne.s32.totalorder %s163, %s164
      %p178 = scmp.eq.s32.totalorder %s27, 1
      %p179 = por %p177, %p178
      %p181 = scmp.ne.s32.totalorder %s164, %s180
      %p182 = scmp.eq.s32.totalorder %s27, 0
      %p183 = por %p181, %p182
      %s184 = ssub.s32 %s29, %s43
      %p185 = scmp.eq.s32.totalorder %s184, 0
      %s187 = sadd.s32 %s186, 1
      %s188 = scalar_select %p185, %s186, %s187
      %p191 = pneg %p185
      %p192 = scmp.eq.s32.totalorder %s21, 1
      %p193 = por %p191, %p192
      %p194 = scmp.ne.s32.totalorder %s186, %s189
      %p195 = scmp.eq.s32.totalorder %s21, 0
      %p196 = por %p194, %p195
      %p197 = scmp.ne.s32.totalorder %s186, %s189
      %p198 = scmp.eq.s32.totalorder %s26, 1
      %p199 = por %p197, %p198
      %p200 = scmp.ne.s32.totalorder %s189, %s190
      %p201 = scmp.eq.s32.totalorder %s26, 0
      %p202 = por %p200, %p201
      %p203 = scmp.ne.s32.totalorder %s189, %s190
      %p204 = scmp.eq.s32.totalorder %s27, 1
      %p205 = por %p203, %p204
      %p207 = scmp.ne.s32.totalorder %s190, %s206
      %p208 = scmp.eq.s32.totalorder %s27, 0
      %p209 = por %p207, %p208
      %s210 = ssub.s32 %s29, %s43
      %p211 = scmp.eq.s32.totalorder %s210, 0
      %s213 = sadd.s32 %s212, 1
      %s214 = scalar_select %p211, %s212, %s213
      %p217 = pneg %p211
      %p218 = scmp.eq.s32.totalorder %s21, 1
      %p219 = por %p217, %p218
      %p220 = scmp.ne.s32.totalorder %s212, %s215
      %p221 = scmp.eq.s32.totalorder %s21, 0
      %p222 = por %p220, %p221
      %p223 = scmp.ne.s32.totalorder %s212, %s215
      %p224 = scmp.eq.s32.totalorder %s26, 1
      %p225 = por %p223, %p224
      %p226 = scmp.ne.s32.totalorder %s215, %s216
      %p227 = scmp.eq.s32.totalorder %s26, 0
      %p228 = por %p226, %p227
      %p229 = scmp.ne.s32.totalorder %s215, %s216
      %p230 = scmp.eq.s32.totalorder %s27, 1
      %p231 = por %p229, %p230
      %p233 = scmp.ne.s32.totalorder %s216, %s232
      %p234 = scmp.eq.s32.totalorder %s27, 0
      %p235 = por %p233, %p234
      %s236 = ssub.s32 %s28, %s47
      %p237 = scmp.eq.s32.totalorder %s236, 0
      %s239 = sadd.s32 %s238, 1
      %s240 = scalar_select %p237, %s238, %s239
      %p243 = pneg %p237
      %p244 = scmp.eq.s32.totalorder %s21, 1
      %p245 = por %p243, %p244
      %p246 = scmp.ne.s32.totalorder %s238, %s241
      %p247 = scmp.eq.s32.totalorder %s21, 0
      %p248 = por %p246, %p247
      %p249 = scmp.ne.s32.totalorder %s238, %s241
      %p250 = scmp.eq.s32.totalorder %s26, 1
      %p251 = por %p249, %p250
      %p252 = scmp.ne.s32.totalorder %s241, %s242
      %p253 = scmp.eq.s32.totalorder %s26, 0
      %p254 = por %p252, %p253
      %p255 = scmp.ne.s32.totalorder %s241, %s242
      %p256 = scmp.eq.s32.totalorder %s27, 1
      %p257 = por %p255, %p256
      %p259 = scmp.ne.s32.totalorder %s242, %s258
      %p260 = scmp.eq.s32.totalorder %s27, 0
      %p261 = por %p259, %p260
      %p262 = scmp.le.s32.totalorder 1, %s21
      %p263 = scmp.lt.s32.totalorder %s21, 3
      %p264 = pnand %p262, %p263
      %p265 = pneg %p264
      // Predicated region
      $region9: #{tpu_custom_call.1} parent=5 // pred_check
        _
      $region10: #{tpu_custom_call.1} parent=5 // pred_check_branch
        %267 = sbr.rel (%p264) target = $region12
      $region11: #{tpu_custom_call.1} parent=5 // pred_region
        %s268 = ssub.s32 %s21, 1
        // Predicated region
        $region13: #{tpu_custom_call.1} parent=11 // pred_check
          %p269 = pneg %p66
        $region14: #{tpu_custom_call.1} parent=11 // pred_check_branch
          %271 = sbr.rel (%p269) target = $region16
        $region15: #{tpu_custom_call.1} parent=11 // pred_region
          %s272 = smul.u32 2, %s31
          %274 = vsyncadd [#allocation6], 0
          %s275 = smul.addr %s272, 8
          %s276 = scalar_lea.hbm %s0, %s275
          %s277 = sshll.u32 %s276, 4
          %s278 = int_to_ptr.hbm [resolvable:$true] %s277
          %s279 = sshll.u32 [#allocation5], 4
          %s280 = int_to_ptr.vmem [resolvable:$true] %s279
          %285 = dma.hbm_to_vmem [thread:$0]  %s278, 256, %s280, [#allocation6], 128, 128, 8
        $region16: #{tpu_custom_call.1} parent=11 // pred_fallthru
          _
      $region12: #{tpu_custom_call.1} parent=5 // pred_fallthru
        _
      %p286 = scmp.lt.s32.totalorder %s21, 2
      // Predicated region
      $region17: #{tpu_custom_call.1} parent=5 // pred_check
        %p287 = pneg %p286
      $region18: #{tpu_custom_call.1} parent=5 // pred_check_branch
        %289 = sbr.rel (%p287) target = $region20
      $region19: #{tpu_custom_call.1} parent=5 // pred_region
        // Predicated region
        $region21: #{tpu_custom_call.1} parent=19 // pred_check
          %p290 = pneg %p88
        $region22: #{tpu_custom_call.1} parent=19 // pred_check_branch
          %292 = sbr.rel (%p290) target = $region24
        $region23: #{tpu_custom_call.1} parent=19 // pred_region
          %s293 = sand.u32 %s21, 1
          %s294 = scalar_lea.sflag [#allocation9], %s293
          %s295 = sand.u32 %s78, 1
          %s296 = smul.addr %s295, 64
          %s297 = scalar_lea.vmem [#allocation8], %s296
          %299 = vsyncadd %s294, 0
          %s300 = smul.addr %s29, 16
          %s301 = sadd.s32 %s30, %s300
          %s302 = smul.addr %s301, 4
          %s303 = scalar_lea.hbm %s1, %s302
          %s304 = sshll.u32 %s303, 4
          %s305 = int_to_ptr.hbm [resolvable:$true] %s304
          %s306 = sshll.u32 %s297, 4
          %s307 = int_to_ptr.vmem [resolvable:$true] %s306
          %312 = dma.hbm_to_vmem [thread:$0]  %s305, 1024, %s307, %s294, 64, 64, 4
        $region24: #{tpu_custom_call.1} parent=19 // pred_fallthru
          _
        // Predicated region
        $region25: #{tpu_custom_call.1} parent=19 // pred_check
          %p313 = pneg %p116
        $region26: #{tpu_custom_call.1} parent=19 // pred_check_branch
          %315 = sbr.rel (%p313) target = $region28
        $region27: #{tpu_custom_call.1} parent=19 // pred_region
          %s316 = sand.u32 %s21, 1
          %s317 = scalar_lea.sflag [#allocation9], %s316
          %s318 = sand.u32 %s106, 1
          %s319 = scalar_lea.vmem [#allocation10], %s318
          %321 = vsyncadd %s317, 0
          %s322 = sadd.s32 %s30, %s29
          %s323 = scalar_lea.hbm %s2, %s322
          %s325 = sshll.u32 %s323, 4
          %s326 = int_to_ptr.hbm [resolvable:$true] %s325
          %s327 = sshll.u32 %s319, 4
          %s328 = int_to_ptr.vmem [resolvable:$true] %s327
          %330 = dma.hbm_to_vmem [thread:$0]  %s326, 16, %s328, %s317
        $region28: #{tpu_custom_call.1} parent=19 // pred_fallthru
          _
        // Predicated region
        $region29: #{tpu_custom_call.1} parent=19 // pred_check
          %p331 = pneg %p144
        $region30: #{tpu_custom_call.1} parent=19 // pred_check_branch
          %333 = sbr.rel (%p331) target = $region32
        $region31: #{tpu_custom_call.1} parent=19 // pred_region
          %s334 = sand.u32 %s21, 1
          %s335 = scalar_lea.sflag [#allocation12], %s334
          %s336 = sand.u32 %s134, 1
          %s337 = smul.addr %s336, 64
          %s338 = scalar_lea.vmem [#allocation11], %s337
          %s339 = smul.u32 16, %s30
          %341 = vsyncadd %s335, 0
          %s342 = smul.addr %s29, 16
          %s343 = sadd.s32 %s339, %s342
          %s344 = smul.addr %s343, 4
          %s345 = scalar_lea.hbm %s3, %s344
          %s346 = sshll.u32 %s345, 4
          %s347 = int_to_ptr.hbm [resolvable:$true] %s346
          %s348 = sshll.u32 %s338, 4
          %s349 = int_to_ptr.vmem [resolvable:$true] %s348
          %354 = dma.hbm_to_vmem [thread:$0]  %s347, 1024, %s349, %s335, 64, 64, 4
        $region32: #{tpu_custom_call.1} parent=19 // pred_fallthru
          _
        // Predicated region
        $region33: #{tpu_custom_call.1} parent=19 // pred_check
          %p355 = pneg %p170
        $region34: #{tpu_custom_call.1} parent=19 // pred_check_branch
          %357 = sbr.rel (%p355) target = $region36
        $region35: #{tpu_custom_call.1} parent=19 // pred_region
          %p358 = scmp.lt.s32.totalorder %s29, 1
          %s359 = scalar_select %p358, %s29, 1
          %s360 = scalar_lea.vmem %s4, %s359
        $region36: #{tpu_custom_call.1} parent=19 // pred_fallthru
          _
        // Predicated region
        $region37: #{tpu_custom_call.1} parent=19 // pred_check
          %p361 = pneg %p196
        $region38: #{tpu_custom_call.1} parent=19 // pred_check_branch
          %363 = sbr.rel (%p361) target = $region40
        $region39: #{tpu_custom_call.1} parent=19 // pred_region
          %p364 = scmp.lt.s32.totalorder %s29, 1
          %s365 = scalar_select %p364, %s29, 1
          %s366 = scalar_lea.vmem %s5, %s365
        $region40: #{tpu_custom_call.1} parent=19 // pred_fallthru
          _
        // Predicated region
        $region41: #{tpu_custom_call.1} parent=19 // pred_check
          %p367 = pneg %p222
        $region42: #{tpu_custom_call.1} parent=19 // pred_check_branch
          %369 = sbr.rel (%p367) target = $region44
        $region43: #{tpu_custom_call.1} parent=19 // pred_region
          %s370 = sand.u32 %s21, 1
          %s371 = scalar_lea.sflag [#allocation12], %s370
          %s372 = sand.u32 %s212, 1
          %s373 = scalar_lea.vmem [#allocation13], %s372
          %375 = vsyncadd %s371, 0
          %s376 = scalar_lea.hbm %s6, %s29
          %s378 = sshll.u32 %s376, 4
          %s379 = int_to_ptr.hbm [resolvable:$true] %s378
          %s380 = sshll.u32 %s373, 4
          %s381 = int_to_ptr.vmem [resolvable:$true] %s380
          %383 = dma.hbm_to_vmem [thread:$0]  %s379, 16, %s381, %s371
        $region44: #{tpu_custom_call.1} parent=19 // pred_fallthru
          _
      $region20: #{tpu_custom_call.1} parent=5 // pred_fallthru
        _
      %p384 = scmp.le.s32.totalorder 1, %s21
      %p385 = scmp.lt.s32.totalorder %s21, 3
      %p386 = pnand %p384, %p385
      %p387 = pneg %p386
      // Predicated region
      $region45: #{tpu_custom_call.1} parent=5 // pred_check
        _
      $region46: #{tpu_custom_call.1} parent=5 // pred_check_branch
        %389 = sbr.rel (%p386) target = $region48
      $region47: #{tpu_custom_call.1} parent=5 // pred_region
        %s390 = ssub.s32 %s21, 1
        // Predicated region
        $region49: #{tpu_custom_call.1} parent=47 // pred_check
          %p391 = pneg %p66
        $region50: #{tpu_custom_call.1} parent=47 // pred_check_branch
          %393 = sbr.rel (%p391) target = $region52
        $region51: #{tpu_custom_call.1} parent=47 // pred_region
          %395 = dma.done [#allocation6], 256
        $region52: #{tpu_custom_call.1} parent=47 // pred_fallthru
          _
        %s396 = sand.u32 %s26, 1
        %s397 = scalar_lea.sflag [#allocation9], %s396
        %s398 = sand.u32 %s81, 1
        %s399 = smul.addr %s398, 64
        %s400 = scalar_lea.vmem [#allocation8], %s399
        // Predicated region
        $region53: #{tpu_custom_call.1} parent=47 // pred_check
          %p401 = pneg %p94
        $region54: #{tpu_custom_call.1} parent=47 // pred_check_branch
          %403 = sbr.rel (%p401) target = $region56
        $region55: #{tpu_custom_call.1} parent=47 // pred_region
          %405 = dma.done %s397, 1024
        $region56: #{tpu_custom_call.1} parent=47 // pred_fallthru
          _
        %s406 = sand.u32 %s26, 1
        %s407 = scalar_lea.sflag [#allocation9], %s406
        %s408 = sand.u32 %s109, 1
        %s409 = scalar_lea.vmem [#allocation10], %s408
        // Predicated region
        $region57: #{tpu_custom_call.1} parent=47 // pred_check
          %p410 = pneg %p122
        $region58: #{tpu_custom_call.1} parent=47 // pred_check_branch
          %412 = sbr.rel (%p410) target = $region60
        $region59: #{tpu_custom_call.1} parent=47 // pred_region
          %414 = dma.done %s407, 16
        $region60: #{tpu_custom_call.1} parent=47 // pred_fallthru
          _
        %s415 = sand.u32 %s26, 1
        %s416 = scalar_lea.sflag [#allocation12], %s415
        %s417 = sand.u32 %s137, 1
        %s418 = smul.addr %s417, 64
        %s419 = scalar_lea.vmem [#allocation11], %s418
        // Predicated region
        $region61: #{tpu_custom_call.1} parent=47 // pred_check
          %p420 = pneg %p150
        $region62: #{tpu_custom_call.1} parent=47 // pred_check_branch
          %422 = sbr.rel (%p420) target = $region64
        $region63: #{tpu_custom_call.1} parent=47 // pred_region
          %424 = dma.done %s416, 1024
        $region64: #{tpu_custom_call.1} parent=47 // pred_fallthru
          _
        %s425 = sand.u32 %s26, 1
        %s426 = scalar_lea.sflag [#allocation12], %s425
        %s427 = sand.u32 %s215, 1
        %s428 = scalar_lea.vmem [#allocation13], %s427
        // Predicated region
        $region65: #{tpu_custom_call.1} parent=47 // pred_check
          %p429 = pneg %p228
        $region66: #{tpu_custom_call.1} parent=47 // pred_check_branch
          %431 = sbr.rel (%p429) target = $region68
        $region67: #{tpu_custom_call.1} parent=47 // pred_region
          %433 = dma.done %s426, 16
        $region68: #{tpu_custom_call.1} parent=47 // pred_fallthru
          _
        %p434 = pneg %p66
        %p435 = pneg %p63
        %s436 = sand.u32 %s26, 1
        %s437 = scalar_lea.sflag [#allocation9], %s436
        %s438 = sand.u32 %s81, 1
        %s439 = smul.addr %s438, 64
        %s440 = scalar_lea.vmem [#allocation8], %s439
        %p441 = pneg %p94
        %p442 = pneg %p91
        %s443 = sand.u32 %s26, 1
        %s444 = scalar_lea.sflag [#allocation9], %s443
        %s445 = sand.u32 %s109, 1
        %s446 = scalar_lea.vmem [#allocation10], %s445
        %p447 = pneg %p122
        %p448 = pneg %p119
        %s449 = sand.u32 %s26, 1
        %s450 = scalar_lea.sflag [#allocation12], %s449
        %s451 = sand.u32 %s137, 1
        %s452 = smul.addr %s451, 64
        %s453 = scalar_lea.vmem [#allocation11], %s452
        %p454 = pneg %p150
        %p455 = pneg %p147
        %p456 = scmp.lt.s32.totalorder %s32, 1
        %s457 = scalar_select %p456, %s32, 1
        %s458 = scalar_lea.vmem %s4, %s457
        %p459 = pneg %p176
        %p460 = pneg %p173
        %p461 = scmp.lt.s32.totalorder %s32, 1
        %s462 = scalar_select %p461, %s32, 1
        %s463 = scalar_lea.vmem %s5, %s462
        %p464 = pneg %p202
        %p465 = pneg %p199
        %s466 = sand.u32 %s26, 1
        %s467 = scalar_lea.sflag [#allocation12], %s466
        %s468 = sand.u32 %s215, 1
        %s469 = scalar_lea.vmem [#allocation13], %s468
        %p470 = pneg %p228
        %p471 = pneg %p225
        %p472 = pneg %p254
        %p473 = pneg %p251
        %s474 = smul.u32 2, %s31
        %s475 = smul.u32 16, %s33
        %p476 = scmp.lt.s32.totalorder %s32, 1
        %s477 = scalar_select %p476, %s32, 1
        %s478 = scalar_lea.vmem %s4, %s477
        %p479 = scmp.lt.s32.totalorder %s32, 1
        %s480 = scalar_select %p479, %s32, 1
        %s481 = scalar_lea.vmem %s5, %s480
        %s482 = smul.u32 2, %s31
        %p483 = scmp.eq.s32.totalorder %s32, 0
        %p484 = scmp.eq.s32.totalorder %s33, 0
        %p485 = pnand %p483, %p484
        %p486 = pneg %p485
        // Predicated region
        $region69: #{tpu_custom_call.1} parent=47 // pred_check
          _
        $region70: #{tpu_custom_call.1} parent=47 // pred_check_branch
          %488 = sbr.rel (%p485) target = $region72
        $region71: #{tpu_custom_call.1} parent=47 // pred_region
          %v489 = vld [vmem:[#allocation5] sm:$0xff]
          %v490 = vld [vmem:[#allocation5 + $0x8] sm:$0xff]
          %491 = vst [vmem:[#allocation2] sm:$0xff] %v489
          %492 = vst [vmem:[#allocation2 + $0x8] sm:$0xff] %v490
          %v493 = vpack.c.bf16 %v489, %v489
          %v494 = vpack.c.bf16 %v490, %v490
          %495 = vst [vmem:[#allocation3] sm:$0xf] %v493
          %496 = vst [vmem:[#allocation3 + $0x4] sm:$0xf] %v494
        $region72: #{tpu_custom_call.1} parent=47 // pred_fallthru
          _
        // Predicated region
        $region73: #{tpu_custom_call.1} parent=47 // pred_check
          %p497 = pneg %p484
        $region74: #{tpu_custom_call.1} parent=47 // pred_check_branch
          %499 = sbr.rel (%p497) target = $region76
        $region75: #{tpu_custom_call.1} parent=47 // pred_region
          %500 = vst [vmem:[#allocation4] sm:$0xff] 0.0
          %501 = vst [vmem:[#allocation4 + $0x8] sm:$0xff] 0.0
        $region76: #{tpu_custom_call.1} parent=47 // pred_fallthru
          _
        %v502 = vld [vmem:[#allocation3] sm:$0xf]
        %v503 = vld [vmem:[#allocation3 + $0x4] sm:$0xf]
        %v504 = vld [vmem:[%s400] sm:$0xf]
        %v505 = vld [vmem:[%s400 + $0x4] sm:$0xf]
        %v506 = vld [vmem:[%s400 + $0x8] sm:$0xf]
        %v507 = vld [vmem:[%s400 + $0xc] sm:$0xf]
        %v508 = vld [vmem:[%s400 + $0x10] sm:$0xf]
        %v509 = vld [vmem:[%s400 + $0x14] sm:$0xf]
        %v510 = vld [vmem:[%s400 + $0x18] sm:$0xf]
        %v511 = vld [vmem:[%s400 + $0x1c] sm:$0xf]
        %v512 = vld [vmem:[%s400 + $0x20] sm:$0xf]
        %v513 = vld [vmem:[%s400 + $0x24] sm:$0xf]
        %v514 = vld [vmem:[%s400 + $0x28] sm:$0xf]
        %v515 = vld [vmem:[%s400 + $0x2c] sm:$0xf]
        %v516 = vld [vmem:[%s400 + $0x30] sm:$0xf]
        %v517 = vld [vmem:[%s400 + $0x34] sm:$0xf]
        %v518 = vld [vmem:[%s400 + $0x38] sm:$0xf]
        %v519 = vld [vmem:[%s400 + $0x3c] sm:$0xf]
        %v520 = vld [vmem:[%s409] sm:$0x1]
        %v522 = vperm.slane %v520, 0
        %v526 = vunpack.c.l.b16 %v502
        %v527 = vunpack.c.l.b16 %v503
        %v528 = vpack.c.b16 %v527, %v526
        %v546 = vunpack.c.l.b16 %v504
        %v547 = vunpack.c.l.b16 %v505
        %v548 = vunpack.c.l.b16 %v506
        %v549 = vunpack.c.l.b16 %v507
        %v550 = vunpack.c.l.b16 %v508
        %v551 = vunpack.c.l.b16 %v509
        %v552 = vunpack.c.l.b16 %v510
        %v553 = vunpack.c.l.b16 %v511
        %v554 = vunpack.c.l.b16 %v512
        %v555 = vunpack.c.l.b16 %v513
        %v556 = vunpack.c.l.b16 %v514
        %v557 = vunpack.c.l.b16 %v515
        %v558 = vunpack.c.l.b16 %v516
        %v559 = vunpack.c.l.b16 %v517
        %v560 = vunpack.c.l.b16 %v518
        %v561 = vunpack.c.l.b16 %v519
        %v562 = vpack.c.b16 %v547, %v546
        %v563 = vpack.c.b16 %v549, %v548
        %v564 = vpack.c.b16 %v551, %v550
        %v565 = vpack.c.b16 %v553, %v552
        %v566 = vpack.c.b16 %v555, %v554
        %v567 = vpack.c.b16 %v557, %v556
        %v568 = vpack.c.b16 %v559, %v558
        %v569 = vpack.c.b16 %v561, %v560
        %578 = vmatpush.bf16.msra.mxu0 %v569
        %579 = vmatpush.bf16.msra.mxu0 %v568
        %580 = vmatpush.bf16.msra.mxu0 %v567
        %581 = vmatpush.bf16.msra.mxu0 %v566
        %582 = vmatpush.bf16.msra.mxu0 %v565
        %583 = vmatpush.bf16.msra.mxu0 %v564
        %584 = vmatpush.bf16.msra.mxu0 %v563
        %585 = vmatpush.bf16.msra.mxu0 %v562
        %586 = vmatmul.bf16.gmra.mxu0 %v528
        %v587 = vpop.f32.mrf.mxu0
        %v588 = vadd.f32 %v522, %v587
        %v589 = vpop.f32.mrf.mxu0
        %v590 = vadd.f32 %v522, %v589
        %591 = vdwg.mxu0
        %v592 = vmax.f32 %v588, 0.0
        %v593 = vmax.f32 %v590, 0.0
        %v594 = vld [vmem:[#allocation4] sm:$0xff]
        %v595 = vld [vmem:[#allocation4 + $0x8] sm:$0xff]
        %v596 = vpack.c.bf16 %v593, %v592
        %v597 = vld [vmem:[%s419] sm:$0xf]
        %v598 = vld [vmem:[%s419 + $0x4] sm:$0xf]
        %v599 = vld [vmem:[%s419 + $0x8] sm:$0xf]
        %v600 = vld [vmem:[%s419 + $0xc] sm:$0xf]
        %v601 = vld [vmem:[%s419 + $0x10] sm:$0xf]
        %v602 = vld [vmem:[%s419 + $0x14] sm:$0xf]
        %v603 = vld [vmem:[%s419 + $0x18] sm:$0xf]
        %v604 = vld [vmem:[%s419 + $0x1c] sm:$0xf]
        %v605 = vld [vmem:[%s419 + $0x20] sm:$0xf]
        %v606 = vld [vmem:[%s419 + $0x24] sm:$0xf]
        %v607 = vld [vmem:[%s419 + $0x28] sm:$0xf]
        %v608 = vld [vmem:[%s419 + $0x2c] sm:$0xf]
        %v609 = vld [vmem:[%s419 + $0x30] sm:$0xf]
        %v610 = vld [vmem:[%s419 + $0x34] sm:$0xf]
        %v611 = vld [vmem:[%s419 + $0x38] sm:$0xf]
        %v612 = vld [vmem:[%s419 + $0x3c] sm:$0xf]
        %v629 = vunpack.c.l.b16 %v597
        %v630 = vunpack.c.l.b16 %v598
        %v631 = vunpack.c.l.b16 %v599
        %v632 = vunpack.c.l.b16 %v600
        %v633 = vunpack.c.l.b16 %v601
        %v634 = vunpack.c.l.b16 %v602
        %v635 = vunpack.c.l.b16 %v603
        %v636 = vunpack.c.l.b16 %v604
        %v637 = vunpack.c.l.b16 %v605
        %v638 = vunpack.c.l.b16 %v606
        %v639 = vunpack.c.l.b16 %v607
        %v640 = vunpack.c.l.b16 %v608
        %v641 = vunpack.c.l.b16 %v609
        %v642 = vunpack.c.l.b16 %v610
        %v643 = vunpack.c.l.b16 %v611
        %v644 = vunpack.c.l.b16 %v612
        %v645 = vpack.c.b16 %v630, %v629
        %v646 = vpack.c.b16 %v632, %v631
        %v647 = vpack.c.b16 %v634, %v633
        %v648 = vpack.c.b16 %v636, %v635
        %v649 = vpack.c.b16 %v638, %v637
        %v650 = vpack.c.b16 %v640, %v639
        %v651 = vpack.c.b16 %v642, %v641
        %v652 = vpack.c.b16 %v644, %v643
        %661 = vmatpush.bf16.msra.mxu0 %v652
        %662 = vmatpush.bf16.msra.mxu0 %v651
        %663 = vmatpush.bf16.msra.mxu0 %v650
        %664 = vmatpush.bf16.msra.mxu0 %v649
        %665 = vmatpush.bf16.msra.mxu0 %v648
        %666 = vmatpush.bf16.msra.mxu0 %v647
        %667 = vmatpush.bf16.msra.mxu0 %v646
        %668 = vmatpush.bf16.msra.mxu0 %v645
        %669 = vmatmul.bf16.gmra.mxu0 %v596
        %v670 = vpop.f32.mrf.mxu0
        %v671 = vadd.f32 0.0, %v670
        %v672 = vpop.f32.mrf.mxu0
        %v673 = vadd.f32 0.0, %v672
        %674 = vdwg.mxu0
        %v675 = vadd.f32 %v594, %v671
        %v676 = vadd.f32 %v595, %v673
        %677 = vst [vmem:[#allocation4] sm:$0xff] %v675
        %678 = vst [vmem:[#allocation4 + $0x8] sm:$0xff] %v676
        // Predicated region
        $region77: #{tpu_custom_call.1} parent=47 // pred_check
          %p679 = pneg %p484
        $region78: #{tpu_custom_call.1} parent=47 // pred_check_branch
          %681 = sbr.rel (%p679) target = $region80
        $region79: #{tpu_custom_call.1} parent=47 // pred_region
          %v682 = vld [vmem:[#allocation2] sm:$0xff]
          %v683 = vld [vmem:[#allocation2 + $0x8] sm:$0xff]
          %v684 = vld [vmem:[#allocation4] sm:$0xff]
          %v685 = vld [vmem:[#allocation4 + $0x8] sm:$0xff]
          %v686 = vadd.f32 %v682, %v684
          %v687 = vadd.f32 %v683, %v685
          %v688 = vld [vmem:[%s478] sm:$0x1]
          %v690 = vperm.slane %v688, 0
          %v692 = vadd.f32 %v686, %v690
          %v693 = vadd.f32 %v687, %v690
          %694 = vadd.xlane.f32.xlu0 %v692
          %v695 = vpop.xlane.xlu0 %694
          %696 = vadd.xlane.f32.xlu0 %v693
          %v697 = vpop.xlane.xlu0 %696
          %v698 = vmul.f32 %v695, 0.03125
          %v699 = vmul.f32 %v697, 0.03125
          %v700 = vsub.f32 %v692, %v698
          %v701 = vsub.f32 %v693, %v699
          %v702 = vlaneseq
          %v703 = vand.u32 %v702, 127
          %vm704 = vcmp.lt.s32.totalorder %v703, 32
          %v705 = vsel %vm704, %v700, 0.0
          %v706 = vsel %vm704, %v701, 0.0
          %v707 = vmul.f32 %v705, %v705
          %v708 = vmul.f32 %v706, %v706
          %709 = vadd.xlane.f32.xlu0 %v707
          %v710 = vpop.xlane.xlu0 %709
          %711 = vadd.xlane.f32.xlu0 %v708
          %v712 = vpop.xlane.xlu0 %711
          %v713 = vmul.f32 %v710, 0.03125
          %v714 = vmul.f32 %v712, 0.03125
          %v715 = vadd.f32 %v713, 1e-05
          %v716 = vadd.f32 %v714, 1e-05
          %v717 = vrsqrt.pop %v715
          %v718 = vmul.f32 %v717, %v715
          %v719 = vmul.f32 %v718, %v717
          %v720 = vmul.f32 0.5, %v719
          %v721 = vsub.f32 1.5, %v720
          %v722 = vmul.f32 %v717, %v721
          %vm723 = vweird.f32 %v715
          %vm724 = vweird.f32 %v717
          %vm725 = vmor %vm723, %vm724
          %v726 = vsel %vm725, %v717, %v722
          %v727 = vrsqrt.pop %v716
          %v728 = vmul.f32 %v727, %v716
          %v729 = vmul.f32 %v728, %v727
          %v730 = vmul.f32 0.5, %v729
          %v731 = vsub.f32 1.5, %v730
          %v732 = vmul.f32 %v727, %v731
          %vm733 = vweird.f32 %v716
          %vm734 = vweird.f32 %v727
          %vm735 = vmor %vm733, %vm734
          %v736 = vsel %vm735, %v727, %v732
          %v737 = vmul.f32 %v700, %v726
          %v738 = vmul.f32 %v701, %v736
          %v739 = vld [vmem:[%s481] sm:$0x1]
          %v741 = vperm.slane %v739, 0
          %v743 = vmul.f32 %v737, %v741
          %v744 = vmul.f32 %v738, %v741
          %v745 = vld [vmem:[%s428] sm:$0x1]
          %v747 = vperm.slane %v745, 0
          %v749 = vadd.f32 %v743, %v747
          %v750 = vadd.f32 %v744, %v747
          %751 = vst [vmem:[#allocation2] sm:$0xff] %v749
          %752 = vst [vmem:[#allocation2 + $0x8] sm:$0xff] %v750
          %v753 = vpack.c.bf16 %v749, %v749
          %v754 = vpack.c.bf16 %v750, %v750
          %755 = vst [vmem:[#allocation3] sm:$0xf] %v753
          %756 = vst [vmem:[#allocation3 + $0x4] sm:$0xf] %v754
        $region80: #{tpu_custom_call.1} parent=47 // pred_fallthru
          _
        %p757 = scmp.eq.s32.totalorder %s32, 1
        %p758 = pnand %p757, %p484
        %p759 = pneg %p758
        // Predicated region
        $region81: #{tpu_custom_call.1} parent=47 // pred_check
          _
        $region82: #{tpu_custom_call.1} parent=47 // pred_check_branch
          %761 = sbr.rel (%p758) target = $region84
        $region83: #{tpu_custom_call.1} parent=47 // pred_region
          %v762 = vld [vmem:[#allocation2] sm:$0xff]
          %v763 = vld [vmem:[#allocation2 + $0x8] sm:$0xff]
          %764 = vst [vmem:[#allocation14] sm:$0xff] %v762
          %765 = vst [vmem:[#allocation14 + $0x8] sm:$0xff] %v763
        $region84: #{tpu_custom_call.1} parent=47 // pred_fallthru
          _
        // Predicated region
        $region85: #{tpu_custom_call.1} parent=47 // pred_check
          %p766 = pneg %p251
        $region86: #{tpu_custom_call.1} parent=47 // pred_check_branch
          %768 = sbr.rel (%p766) target = $region88
        $region87: #{tpu_custom_call.1} parent=47 // pred_region
          %s769 = smul.u32 2, %s31
          %771 = vsyncadd [#allocation7], 0
          %s772 = smul.addr %s769, 8
          %s773 = scalar_lea.hbm %s7, %s772
          %s774 = sshll.u32 [#allocation14], 4
          %s775 = int_to_ptr.vmem [resolvable:$true] %s774
          %s776 = sshll.u32 %s773, 4
          %s777 = int_to_ptr.hbm [resolvable:$true] %s776
          %782 = dma.vmem_to_hbm [thread:$0]  %s775, 256, %s777, [#allocation7], 128, 128, 8
        $region88: #{tpu_custom_call.1} parent=47 // pred_fallthru
          _
        // Predicated region
        $region89: #{tpu_custom_call.1} parent=47 // pred_check
          %p783 = pneg %p251
        $region90: #{tpu_custom_call.1} parent=47 // pred_check_branch
          %785 = sbr.rel (%p783) target = $region92
        $region91: #{tpu_custom_call.1} parent=47 // pred_region
          %787 = dma.done [#allocation7], 256
        $region92: #{tpu_custom_call.1} parent=47 // pred_fallthru
          _
      $region48: #{tpu_custom_call.1} parent=5 // pred_fallthru
        _
      %p788 = scmp.le.s32.totalorder 2, %s21
      // Predicated region
      $region93: #{tpu_custom_call.1} parent=5 // pred_check
        %p789 = pneg %p788
      $region94: #{tpu_custom_call.1} parent=5 // pred_check_branch
        %791 = sbr.rel (%p789) target = $region96
      $region95: #{tpu_custom_call.1} parent=5 // pred_region
        %s792 = ssub.s32 %s21, 2
      $region96: #{tpu_custom_call.1} parent=5 // pred_fallthru
        _
    $region6: #{tpu_custom_call.1} parent=1 // loop_footer
      %s25 = sadd.s32 1, %s21
    $region7: #{tpu_custom_call.1} parent=1 // loop_footer_branch
      %20 = sbr.rel target = $region3
    $region8: #{tpu_custom_call.1} parent=1 // loop_exit
      _
    %793 = vsyncpa [#allocation6], 1
    %s794 = scalar_lea.sflag [#allocation6], 1
    %795 = vsyncpa %s794, 1
    %796 = vsyncpa [#allocation9], 1
    %s797 = scalar_lea.sflag [#allocation9], 1
    %798 = vsyncpa %s797, 1
    %799 = vsyncpa [#allocation12], 1
    %s800 = scalar_lea.sflag [#allocation12], 1
    %801 = vsyncpa %s800, 1
    %802 = vsyncpa [#allocation7], 1
    %s803 = scalar_lea.sflag [#allocation7], 1
    %804 = vsyncpa %s803, 1

</llo_original>
